<compile_context>
chip_gen: v7x
topology: tpu7x:2x2x1
jax: 0.10.0
libtpu: 0.0.40
codegen_flags: <defaults>
</compile_context>

<pallas_src>
import jax
import jax.numpy as jnp
from jax.experimental import pallas as pl
from jax.experimental.pallas import tpu as pltpu

HID = 128        # hidden dim 64 zero-padded to 128 lanes (VMEM only)
GEMM_OUT = 128   # logits dim 10 zero-padded to 128 for the last GEMM (VMEM only)
OUT_STORE = 16   # narrow HBM writeback width (>= 10); wrapper slices [:, :10]


def mlp_kernel(x_ref, w1_ref, b1_ref, w2_ref, b2_ref, w3_ref, b3_ref, o_ref):
    # Layer 1: (TB, 784) @ (784, 128) + (1, 128), ReLU  (f32 accumulation on MXU)
    h1 = jnp.dot(x_ref[...], w1_ref[...], preferred_element_type=jnp.float32)
    h1 = jnp.maximum(h1 + b1_ref[...], 0.0)
    # Layer 2 (64 padded to 128): (TB, 128) @ (128, 128) + (1, 128), ReLU
    h2 = jnp.dot(h1.astype(w2_ref.dtype), w2_ref[...],
                 preferred_element_type=jnp.float32)
    h2 = jnp.maximum(h2 + b2_ref[...], 0.0)
    # Layer 3 (10 padded to 128): (TB, 128) @ (128, 128) + (1, 128)
    logits = jnp.dot(h2.astype(w3_ref.dtype), w3_ref[...],
                     preferred_element_type=jnp.float32) + b3_ref[...]
    # Narrow writeback: only the first OUT_STORE lanes go back to HBM.
    o_ref[...] = logits[:, :o_ref.shape[-1]].astype(o_ref.dtype)


def simple_nn_forward(x, params, *, tb=1024):
    """Forward pass of SimpleNN. x is (B, 1, 28, 28) (or anything flattening to
    784 features per row); params are (w1,b1,w2,b2,w3,b3) with weights stored
    as (in_features, out_features)."""
    w1, b1, w2, b2, w3, b3 = params
    B = x.shape[0]
    x_flat = x.reshape(B, 28 * 28)               # == x.view(-1, 784); no dtype cast

    # Stream x in its own (floating) dtype; the kernel accumulates in f32.
    if not jnp.issubdtype(x_flat.dtype, jnp.floating):
        # TODO(synk): in-kernel uint8 dequantization (keep raw pixels in HBM).
        x_flat = x_flat.astype(jnp.float32)
    cdtype = x_flat.dtype

    # Weights in the streaming dtype; biases stay f32 (added after f32 accum).
    w1p = w1.astype(cdtype)                                               # (784,128)
    b1p = b1.astype(jnp.float32)                                          # (1,128)
    w2p = jnp.zeros((128, HID), cdtype).at[:, :64].set(w2.astype(cdtype))
    b2p = jnp.zeros((1, HID), jnp.float32).at[:, :64].set(b2.astype(jnp.float32))
    w3p = jnp.zeros((HID, GEMM_OUT), cdtype).at[:64, :10].set(w3.astype(cdtype))
    b3p = jnp.zeros((1, GEMM_OUT), jnp.float32).at[:, :10].set(b3.astype(jnp.float32))

    # Batch tiling: NO HBM padding of x; Pallas masks the ragged last tile.
    if B <= tb:
        tb_eff = B                      # whole-array block: always a legal shape
    else:
        tb_eff = max(8, (tb // 8) * 8)  # sublane-aligned tiles
        # v7x: the (parallel) batch grid is split across 2 TensorCores; avoid a
        # small odd tile count leaving one core ~idle. Harmless on v5e/v6e.
        while (tb_eff > 256 and pl.cdiv(B, tb_eff) < 8
               and pl.cdiv(B, tb_eff) % 2 == 1):
            tb_eff //= 2
    grid = (pl.cdiv(B, tb_eff),)

    # Weights/biases: same block every grid step -> stay resident in VMEM.
    fixed = lambda shp: pl.BlockSpec(shp, lambda i: (0, 0))

    out = pl.pallas_call(
        mlp_kernel,
        out_shape=jax.ShapeDtypeStruct((B, OUT_STORE), jnp.float32),
        grid=grid,
        in_specs=[
            pl.BlockSpec((tb_eff, 784), lambda i: (i, 0)),   # x tiles, pipelined
            fixed((784, 128)), fixed((1, 128)),              # layer 1
            fixed((128, HID)), fixed((1, HID)),              # layer 2 (padded)
            fixed((HID, GEMM_OUT)), fixed((1, GEMM_OUT)),    # layer 3 (padded)
        ],
        out_specs=pl.BlockSpec((tb_eff, OUT_STORE), lambda i: (i, 0)),
        compiler_params=pltpu.CompilerParams(
            dimension_semantics=("parallel",),   # shard batch tiles across TCs
            vmem_limit_bytes=32 << 20,           # ~8 MiB live at tb=1024 f32
        ),
    )(x_flat, w1p, b1p, w2p, b2p, w3p, b3p)

    # Strip the lane padding of the 10-wide logits (rows already exactly B).
    return out[:, :10]


def init_params(key):
    # Deterministic synthetic init (shapes follow nn.Linear in the module,
    # stored transposed as (in_features, out_features)).
    k1, k2, k3, k4, k5, k6 = jax.random.split(key, 6)
    w1 = jax.random.normal(k1, (784, 128), jnp.float32) * 0.05
    b1 = jax.random.normal(k2, (1, 128), jnp.float32) * 0.05
    w2 = jax.random.normal(k3, (128, 64), jnp.float32) * 0.05
    b2 = jax.random.normal(k4, (1, 64), jnp.float32) * 0.05
    w3 = jax.random.normal(k5, (64, 10), jnp.float32) * 0.05
    b3 = jax.random.normal(k6, (1, 10), jnp.float32) * 0.05
    return (w1, b1, w2, b2, w3, b3)


def reference_forward(x, params):
    w1, b1, w2, b2, w3, b3 = params
    xf = x.reshape(x.shape[0], -1).astype(jnp.float32)
    h1 = jnp.maximum(xf @ w1 + b1, 0.0)
    h2 = jnp.maximum(h1 @ w2 + b2, 0.0)
    return h2 @ w3 + b3


if __name__ == "__main__":
    key = jax.random.PRNGKey(0)
    kx, kp = jax.random.split(key)
    # Small MNIST-like batch: (B, C, H, W) = (2, 1, 28, 28), NCHW as in PyTorch.
    x = jax.random.normal(kx, (2, 1, 28, 28), jnp.float32)
    params = init_params(kp)

    out = simple_nn_forward(x, params)
    jax.block_until_ready(out)

    ref = reference_forward(x, params)
    assert out.shape == (2, 10)
    assert jnp.allclose(out, ref, atol=1e-4, rtol=1e-4)

    # Exercise the multi-tile path with a ragged batch (2 tiles of 1024, last
    # tile only 6 valid rows -> masked writeback, no wrapper-side padding).
    kx2 = jax.random.fold_in(kx, 1)
    x_big = jax.random.normal(kx2, (1030, 1, 28, 28), jnp.float32)
    out_big = simple_nn_forward(x_big, params)
    jax.block_until_ready(out_big)
    ref_big = reference_forward(x_big, params)
    assert out_big.shape == (1030, 10)
    assert jnp.allclose(out_big, ref_big, atol=1e-4, rtol=1e-4)

    print("KERNEL_OK")
</pallas_src>

<mosaic_0001>
module attributes {stable_mosaic.version = 11 : i64} {
  func.func @mlp_kernel(%arg0: i32, %arg1: memref<2x784xf32, #tpu.memory_space<vmem>>, %arg2: memref<784x128xf32, #tpu.memory_space<vmem>>, %arg3: memref<1x128xf32, #tpu.memory_space<vmem>>, %arg4: memref<128x128xf32, #tpu.memory_space<vmem>>, %arg5: memref<1x128xf32, #tpu.memory_space<vmem>>, %arg6: memref<128x128xf32, #tpu.memory_space<vmem>>, %arg7: memref<1x128xf32, #tpu.memory_space<vmem>>, %arg8: memref<2x16xf32, #tpu.memory_space<vmem>>) attributes {dimension_semantics = [#tpu.dimension_semantics<parallel>], iteration_bounds = array<i64: 1>, scalar_prefetch = 0 : i64, scratch_operands = 0 : i64, tpu.core_type = #tpu.core_type<tc>, window_params = [{transform_indices = @transform_0, window_bounds = array<i64: 2, 784>}, {pipeline_mode = #tpu.pipeline_mode<synchronous>, transform_indices = @transform_1, window_bounds = array<i64: 784, 128>}, {pipeline_mode = #tpu.pipeline_mode<synchronous>, transform_indices = @transform_2, window_bounds = array<i64: 1, 128>}, {pipeline_mode = #tpu.pipeline_mode<synchronous>, transform_indices = @transform_3, window_bounds = array<i64: 128, 128>}, {pipeline_mode = #tpu.pipeline_mode<synchronous>, transform_indices = @transform_4, window_bounds = array<i64: 1, 128>}, {pipeline_mode = #tpu.pipeline_mode<synchronous>, transform_indices = @transform_5, window_bounds = array<i64: 128, 128>}, {pipeline_mode = #tpu.pipeline_mode<synchronous>, transform_indices = @transform_6, window_bounds = array<i64: 1, 128>}, {transform_indices = @transform_7, window_bounds = array<i64: 2, 16>}]} {
    %c0 = arith.constant 0 : index
    %c0_0 = arith.constant 0 : index
    %0 = vector.load %arg1[%c0, %c0_0] : memref<2x784xf32, #tpu.memory_space<vmem>>, vector<2x784xf32>
    %c0_1 = arith.constant 0 : index
    %c0_2 = arith.constant 0 : index
    %1 = vector.load %arg2[%c0_1, %c0_2] : memref<784x128xf32, #tpu.memory_space<vmem>>, vector<784x128xf32>
    %cst = arith.constant dense<0.000000e+00> : vector<2x128xf32>
    %2 = tpu.matmul %0, %1, %cst {dimension_numbers = #tpu.dot_dimension_numbers<[1], [0], [0], [1], [0, 0, 1, 1], [], []>} : vector<2x784xf32>, vector<784x128xf32>, vector<2x128xf32> -> vector<2x128xf32>
    %c0_3 = arith.constant 0 : index
    %c0_4 = arith.constant 0 : index
    %3 = vector.load %arg3[%c0_3, %c0_4] : memref<1x128xf32, #tpu.memory_space<vmem>>, vector<1x128xf32>
    %4 = vector.broadcast %3 : vector<1x128xf32> to vector<2x128xf32>
    %5 = arith.addf %2, %4 : vector<2x128xf32>
    %cst_5 = arith.constant 0.000000e+00 : f32
    %6 = vector.broadcast %cst_5 : f32 to vector<2x128xf32>
    %7 = arith.maximumf %5, %6 : vector<2x128xf32>
    %c0_6 = arith.constant 0 : index
    %c0_7 = arith.constant 0 : index
    %8 = vector.load %arg4[%c0_6, %c0_7] : memref<128x128xf32, #tpu.memory_space<vmem>>, vector<128x128xf32>
    %cst_8 = arith.constant dense<0.000000e+00> : vector<2x128xf32>
    %9 = tpu.matmul %7, %8, %cst_8 {dimension_numbers = #tpu.dot_dimension_numbers<[1], [0], [0], [1], [0, 0, 1, 1], [], []>} : vector<2x128xf32>, vector<128x128xf32>, vector<2x128xf32> -> vector<2x128xf32>
    %c0_9 = arith.constant 0 : index
    %c0_10 = arith.constant 0 : index
    %10 = vector.load %arg5[%c0_9, %c0_10] : memref<1x128xf32, #tpu.memory_space<vmem>>, vector<1x128xf32>
    %11 = vector.broadcast %10 : vector<1x128xf32> to vector<2x128xf32>
    %12 = arith.addf %9, %11 : vector<2x128xf32>
    %cst_11 = arith.constant 0.000000e+00 : f32
    %13 = vector.broadcast %cst_11 : f32 to vector<2x128xf32>
    %14 = arith.maximumf %12, %13 : vector<2x128xf32>
    %c0_12 = arith.constant 0 : index
    %c0_13 = arith.constant 0 : index
    %15 = vector.load %arg6[%c0_12, %c0_13] : memref<128x128xf32, #tpu.memory_space<vmem>>, vector<128x128xf32>
    %cst_14 = arith.constant dense<0.000000e+00> : vector<2x128xf32>
    %16 = tpu.matmul %14, %15, %cst_14 {dimension_numbers = #tpu.dot_dimension_numbers<[1], [0], [0], [1], [0, 0, 1, 1], [], []>} : vector<2x128xf32>, vector<128x128xf32>, vector<2x128xf32> -> vector<2x128xf32>
    %c0_15 = arith.constant 0 : index
    %c0_16 = arith.constant 0 : index
    %17 = vector.load %arg7[%c0_15, %c0_16] : memref<1x128xf32, #tpu.memory_space<vmem>>, vector<1x128xf32>
    %18 = vector.broadcast %17 : vector<1x128xf32> to vector<2x128xf32>
    %19 = arith.addf %16, %18 : vector<2x128xf32>
    %20 = vector.extract_strided_slice %19 {offsets = [0, 0], sizes = [2, 16], strides = [1, 1]} : vector<2x128xf32> to vector<2x16xf32>
    %c0_17 = arith.constant 0 : index
    %c0_18 = arith.constant 0 : index
    %21 = vector.load %arg8[%c0_17, %c0_18] : memref<2x16xf32, #tpu.memory_space<vmem>>, vector<2x16xf32>
    tpu.vector_store %arg8[%c0_17, %c0_18], %20 {strides = array<i32>} : memref<2x16xf32, #tpu.memory_space<vmem>>, vector<2x16xf32>,
    return
  }
  func.func @transform_0(%arg0: i32) -> (i32, i32) {
    %c0_i32 = arith.constant 0 : i32
    %c0_i32_0 = arith.constant 0 : i32
    return %arg0, %c0_i32 : i32, i32
  }
  func.func @transform_1(%arg0: i32) -> (i32, i32) {
    %c0_i32 = arith.constant 0 : i32
    %c0_i32_0 = arith.constant 0 : i32
    %c0_i32_1 = arith.constant 0 : i32
    return %c0_i32, %c0_i32_0 : i32, i32
  }
  func.func @transform_2(%arg0: i32) -> (i32, i32) {
    %c0_i32 = arith.constant 0 : i32
    %c0_i32_0 = arith.constant 0 : i32
    %c0_i32_1 = arith.constant 0 : i32
    return %c0_i32, %c0_i32_0 : i32, i32
  }
  func.func @transform_3(%arg0: i32) -> (i32, i32) {
    %c0_i32 = arith.constant 0 : i32
    %c0_i32_0 = arith.constant 0 : i32
    %c0_i32_1 = arith.constant 0 : i32
    return %c0_i32, %c0_i32_0 : i32, i32
  }
  func.func @transform_4(%arg0: i32) -> (i32, i32) {
    %c0_i32 = arith.constant 0 : i32
    %c0_i32_0 = arith.constant 0 : i32
    %c0_i32_1 = arith.constant 0 : i32
    return %c0_i32, %c0_i32_0 : i32, i32
  }
  func.func @transform_5(%arg0: i32) -> (i32, i32) {
    %c0_i32 = arith.constant 0 : i32
    %c0_i32_0 = arith.constant 0 : i32
    %c0_i32_1 = arith.constant 0 : i32
    return %c0_i32, %c0_i32_0 : i32, i32
  }
  func.func @transform_6(%arg0: i32) -> (i32, i32) {
    %c0_i32 = arith.constant 0 : i32
    %c0_i32_0 = arith.constant 0 : i32
    %c0_i32_1 = arith.constant 0 : i32
    return %c0_i32, %c0_i32_0 : i32, i32
  }
  func.func @transform_7(%arg0: i32) -> (i32, i32) {
    %c0_i32 = arith.constant 0 : i32
    %c0_i32_0 = arith.constant 0 : i32
    return %arg0, %c0_i32 : i32, i32
  }
}

</mosaic_0001>

<llo_original>
// kernel: tpu_custom_call.1
$region0: #{tpu_custom_call.1}
  #allocation0 [shape = 'u32[]', space=smem, size = 0x4, offset = 0x4, fixed_abs, tag = 'smem constant byte address 0x4 - core index']
  #allocation1 [shape = 'u32[144,128]{1,0:T(1,128)}', space=vmem, size = 0x12000, scoped, tag = 'internal scratch']
  %s0 = inlined_call_operand.hbm [shape: f32[2,784], index: 0, kind: input, shape index: {}]
  %s1 = inlined_call_operand.hbm [shape: f32[784,128], index: 1, kind: input, shape index: {}]
  %s2 = inlined_call_operand.vmem [shape: f32[1,128], index: 2, kind: input, shape index: {}]
  %s3 = inlined_call_operand.hbm [shape: f32[128,128], index: 3, kind: input, shape index: {}]
  %s4 = inlined_call_operand.vmem [shape: f32[1,128], index: 4, kind: input, shape index: {}]
  %s5 = inlined_call_operand.hbm [shape: f32[128,128], index: 5, kind: input, shape index: {}]
  %s6 = inlined_call_operand.vmem [shape: f32[1,128], index: 6, kind: input, shape index: {}]
  %s7 = inlined_call_operand.hbm [shape: f32[2,16], index: 7, kind: output, shape index: {}]
  %s8 = sld [smem:[#allocation0]]
  $region54: #{tpu_custom_call.1} parent=0
    _
  %s10 = ssub.s32 1, %s8
  %s11 = scalar_select 0, %s10, %s8
  $region1: #{tpu_custom_call.1} parent=0
    #allocation2 [shape = 'u8[7168]{0}', space=vmem, size = 0x1c00, scoped, tag = 'input window, operand 0, single buffered']
    #allocation3 [shape = 's32[1]{0}', space=sflag, size = 0x4, scoped, tag = 'scoped memory for tpu_custom_call.1']
    #allocation4 [shape = 's32[1]{0}', space=sflag, size = 0x4, scoped, tag = 'scoped memory for tpu_custom_call.1']
    #allocation5 [shape = 'u8[401408]{0}', space=vmem, size = 0x62000, scoped, tag = 'input window, operand 1, single buffered']
    #allocation6 [shape = 's32[1]{0}', space=sflag, size = 0x4, scoped, tag = 'scoped memory for tpu_custom_call.1']
    #allocation7 [shape = 'u8[65536]{0}', space=vmem, size = 0x10000, scoped, tag = 'input window, operand 3, single buffered']
    #allocation8 [shape = 'u8[65536]{0}', space=vmem, size = 0x10000, scoped, tag = 'input window, operand 5, single buffered']
    #allocation9 [shape = 's32[1]{0}', space=sflag, size = 0x4, scoped, tag = 'scoped memory for tpu_custom_call.1']
    #allocation10 [shape = 'u8[1024]{0}', space=vmem, size = 0x400, scoped, tag = 'output window, operand 0, single buffered']
    %12 = vsyncpa [#allocation3], 0
    %13 = vsyncpa [#allocation6], 0
    %14 = vsyncpa [#allocation9], 0
    %15 = vsyncpa [#allocation4], 0
    // Predicated region
    $region2: #{tpu_custom_call.1} parent=1 // pred_check
      _
    $region3: #{tpu_custom_call.1} parent=1 // pred_check_branch
      %17 = sbr.rel (0) target = $region5
    $region4: #{tpu_custom_call.1} parent=1 // pred_region
      %s19 = ssub.s32 224, 224
      %20 = vsyncadd [#allocation3], %s19
      %s22 = sshll.u32 [#allocation2], 4
      %s23 = int_to_ptr.vmem [resolvable:$true] %s22
      %25 = dma.hbm_to_vmem [thread:$0]  %s0, 224, %s23, [#allocation3]
    $region5: #{tpu_custom_call.1} parent=1 // pred_fallthru
      _
    // Predicated region
    $region6: #{tpu_custom_call.1} parent=1 // pred_check
      _
    $region7: #{tpu_custom_call.1} parent=1 // pred_check_branch
      %27 = sbr.rel (0) target = $region9
    $region8: #{tpu_custom_call.1} parent=1 // pred_region
      %s29 = ssub.s32 12544, 12544
      %30 = vsyncadd [#allocation6], %s29
      %s31 = sshll.u32 [#allocation5], 4
      %s32 = int_to_ptr.vmem [resolvable:$true] %s31
      %37 = dma.hbm_to_vmem [thread:$0]  %s1, 12544, %s32, [#allocation6], 128, 128, 8
    $region9: #{tpu_custom_call.1} parent=1 // pred_fallthru
      _
    // Predicated region
    $region10: #{tpu_custom_call.1} parent=1 // pred_check
      _
    $region11: #{tpu_custom_call.1} parent=1 // pred_check_branch
      %39 = sbr.rel (0) target = $region13
    $region12: #{tpu_custom_call.1} parent=1 // pred_region
      _
    $region13: #{tpu_custom_call.1} parent=1 // pred_fallthru
      _
    // Predicated region
    $region14: #{tpu_custom_call.1} parent=1 // pred_check
      _
    $region15: #{tpu_custom_call.1} parent=1 // pred_check_branch
      %41 = sbr.rel (0) target = $region17
    $region16: #{tpu_custom_call.1} parent=1 // pred_region
      %s43 = ssub.s32 2048, 2048
      %44 = vsyncadd [#allocation6], %s43
      %s45 = sshll.u32 [#allocation7], 4
      %s46 = int_to_ptr.vmem [resolvable:$true] %s45
      %51 = dma.hbm_to_vmem [thread:$0]  %s3, 2048, %s46, [#allocation6], 128, 128, 8
    $region17: #{tpu_custom_call.1} parent=1 // pred_fallthru
      _
    // Predicated region
    $region18: #{tpu_custom_call.1} parent=1 // pred_check
      _
    $region19: #{tpu_custom_call.1} parent=1 // pred_check_branch
      %53 = sbr.rel (0) target = $region21
    $region20: #{tpu_custom_call.1} parent=1 // pred_region
      _
    $region21: #{tpu_custom_call.1} parent=1 // pred_fallthru
      _
    // Predicated region
    $region22: #{tpu_custom_call.1} parent=1 // pred_check
      _
    $region23: #{tpu_custom_call.1} parent=1 // pred_check_branch
      %55 = sbr.rel (0) target = $region25
    $region24: #{tpu_custom_call.1} parent=1 // pred_region
      %s57 = ssub.s32 2048, 2048
      %58 = vsyncadd [#allocation9], %s57
      %s59 = sshll.u32 [#allocation8], 4
      %s60 = int_to_ptr.vmem [resolvable:$true] %s59
      %65 = dma.hbm_to_vmem [thread:$0]  %s5, 2048, %s60, [#allocation9], 128, 128, 8
    $region25: #{tpu_custom_call.1} parent=1 // pred_fallthru
      _
    // Predicated region
    $region26: #{tpu_custom_call.1} parent=1 // pred_check
      _
    $region27: #{tpu_custom_call.1} parent=1 // pred_check_branch
      %67 = sbr.rel (0) target = $region29
    $region28: #{tpu_custom_call.1} parent=1 // pred_region
      _
    $region29: #{tpu_custom_call.1} parent=1 // pred_fallthru
      _
    // Predicated region
    $region30: #{tpu_custom_call.1} parent=1 // pred_check
      _
    $region31: #{tpu_custom_call.1} parent=1 // pred_check_branch
      %69 = sbr.rel (0) target = $region33
    $region32: #{tpu_custom_call.1} parent=1 // pred_region
      %70 = dma.done [#allocation3], 224
    $region33: #{tpu_custom_call.1} parent=1 // pred_fallthru
      _
    // Predicated region
    $region34: #{tpu_custom_call.1} parent=1 // pred_check
      _
    $region35: #{tpu_custom_call.1} parent=1 // pred_check_branch
      %72 = sbr.rel (0) target = $region37
    $region36: #{tpu_custom_call.1} parent=1 // pred_region
      %73 = dma.done [#allocation6], 12544
    $region37: #{tpu_custom_call.1} parent=1 // pred_fallthru
      _
    // Predicated region
    $region38: #{tpu_custom_call.1} parent=1 // pred_check
      _
    $region39: #{tpu_custom_call.1} parent=1 // pred_check_branch
      %75 = sbr.rel (0) target = $region41
    $region40: #{tpu_custom_call.1} parent=1 // pred_region
      %76 = dma.done [#allocation6], 2048
    $region41: #{tpu_custom_call.1} parent=1 // pred_fallthru
      _
    // Predicated region
    $region42: #{tpu_custom_call.1} parent=1 // pred_check
      _
    $region43: #{tpu_custom_call.1} parent=1 // pred_check_branch
      %78 = sbr.rel (0) target = $region45
    $region44: #{tpu_custom_call.1} parent=1 // pred_region
      %79 = dma.done [#allocation9], 2048
    $region45: #{tpu_custom_call.1} parent=1 // pred_fallthru
      _
    %v80 = vld [vmem:[#allocation2] sm:$0xff]
    %v81 = vld [vmem:[#allocation2 + $0x8] sm:$0x3f]
    %v82 = vld [vmem:[#allocation5] sm:$0xff]
    %v83 = vld [vmem:[#allocation5 + $0x8] sm:$0xff]
    %v84 = vld [vmem:[#allocation5 + $0x10] sm:$0xff]
    %v85 = vld [vmem:[#allocation5 + $0x18] sm:$0xff]
    %v86 = vld [vmem:[#allocation5 + $0x20] sm:$0xff]
    %v87 = vld [vmem:[#allocation5 + $0x28] sm:$0xff]
    %v88 = vld [vmem:[#allocation5 + $0x30] sm:$0xff]
    %v89 = vld [vmem:[#allocation5 + $0x38] sm:$0xff]
    %v90 = vld [vmem:[#allocation5 + $0x40] sm:$0xff]
    %v91 = vld [vmem:[#allocation5 + $0x48] sm:$0xff]
    %v92 = vld [vmem:[#allocation5 + $0x50] sm:$0xff]
    %v93 = vld [vmem:[#allocation5 + $0x58] sm:$0xff]
    %v94 = vld [vmem:[#allocation5 + $0x60] sm:$0xff]
    %v95 = vld [vmem:[#allocation5 + $0x68] sm:$0xff]
    %v96 = vld [vmem:[#allocation5 + $0x70] sm:$0xff]
    %v97 = vld [vmem:[#allocation5 + $0x78] sm:$0xff]
    %v98 = vld [vmem:[#allocation5 + $0x80] sm:$0xff]
    %v99 = vld [vmem:[#allocation5 + $0x88] sm:$0xff]
    %v100 = vld [vmem:[#allocation5 + $0x90] sm:$0xff]
    %v101 = vld [vmem:[#allocation5 + $0x98] sm:$0xff]
    %v102 = vld [vmem:[#allocation5 + $0xa0] sm:$0xff]
    %v103 = vld [vmem:[#allocation5 + $0xa8] sm:$0xff]
    %v104 = vld [vmem:[#allocation5 + $0xb0] sm:$0xff]
    %v105 = vld [vmem:[#allocation5 + $0xb8] sm:$0xff]
    %v106 = vld [vmem:[#allocation5 + $0xc0] sm:$0xff]
    %v107 = vld [vmem:[#allocation5 + $0xc8] sm:$0xff]
    %v108 = vld [vmem:[#allocation5 + $0xd0] sm:$0xff]
    %v109 = vld [vmem:[#allocation5 + $0xd8] sm:$0xff]
    %v110 = vld [vmem:[#allocation5 + $0xe0] sm:$0xff]
    %v111 = vld [vmem:[#allocation5 + $0xe8] sm:$0xff]
    %v112 = vld [vmem:[#allocation5 + $0xf0] sm:$0xff]
    %v113 = vld [vmem:[#allocation5 + $0xf8] sm:$0xff]
    %v114 = vld [vmem:[#allocation5 + $0x100] sm:$0xff]
    %v115 = vld [vmem:[#allocation5 + $0x108] sm:$0xff]
    %v116 = vld [vmem:[#allocation5 + $0x110] sm:$0xff]
    %v117 = vld [vmem:[#allocation5 + $0x118] sm:$0xff]
    %v118 = vld [vmem:[#allocation5 + $0x120] sm:$0xff]
    %v119 = vld [vmem:[#allocation5 + $0x128] sm:$0xff]
    %v120 = vld [vmem:[#allocation5 + $0x130] sm:$0xff]
    %v121 = vld [vmem:[#allocation5 + $0x138] sm:$0xff]
    %v122 = vld [vmem:[#allocation5 + $0x140] sm:$0xff]
    %v123 = vld [vmem:[#allocation5 + $0x148] sm:$0xff]
    %v124 = vld [vmem:[#allocation5 + $0x150] sm:$0xff]
    %v125 = vld [vmem:[#allocation5 + $0x158] sm:$0xff]
    %v126 = vld [vmem:[#allocation5 + $0x160] sm:$0xff]
    %v127 = vld [vmem:[#allocation5 + $0x168] sm:$0xff]
    %v128 = vld [vmem:[#allocation5 + $0x170] sm:$0xff]
    %v129 = vld [vmem:[#allocation5 + $0x178] sm:$0xff]
    %v130 = vld [vmem:[#allocation5 + $0x180] sm:$0xff]
    %v131 = vld [vmem:[#allocation5 + $0x188] sm:$0xff]
    %v132 = vld [vmem:[#allocation5 + $0x190] sm:$0xff]
    %v133 = vld [vmem:[#allocation5 + $0x198] sm:$0xff]
    %v134 = vld [vmem:[#allocation5 + $0x1a0] sm:$0xff]
    %v135 = vld [vmem:[#allocation5 + $0x1a8] sm:$0xff]
    %v136 = vld [vmem:[#allocation5 + $0x1b0] sm:$0xff]
    %v137 = vld [vmem:[#allocation5 + $0x1b8] sm:$0xff]
    %v138 = vld [vmem:[#allocation5 + $0x1c0] sm:$0xff]
    %v139 = vld [vmem:[#allocation5 + $0x1c8] sm:$0xff]
    %v140 = vld [vmem:[#allocation5 + $0x1d0] sm:$0xff]
    %v141 = vld [vmem:[#allocation5 + $0x1d8] sm:$0xff]
    %v142 = vld [vmem:[#allocation5 + $0x1e0] sm:$0xff]
    %v143 = vld [vmem:[#allocation5 + $0x1e8] sm:$0xff]
    %v144 = vld [vmem:[#allocation5 + $0x1f0] sm:$0xff]
    %v145 = vld [vmem:[#allocation5 + $0x1f8] sm:$0xff]
    %v146 = vld [vmem:[#allocation5 + $0x200] sm:$0xff]
    %v147 = vld [vmem:[#allocation5 + $0x208] sm:$0xff]
    %v148 = vld [vmem:[#allocation5 + $0x210] sm:$0xff]
    %v149 = vld [vmem:[#allocation5 + $0x218] sm:$0xff]
    %v150 = vld [vmem:[#allocation5 + $0x220] sm:$0xff]
    %v151 = vld [vmem:[#allocation5 + $0x228] sm:$0xff]
    %v152 = vld [vmem:[#allocation5 + $0x230] sm:$0xff]
    %v153 = vld [vmem:[#allocation5 + $0x238] sm:$0xff]
    %v154 = vld [vmem:[#allocation5 + $0x240] sm:$0xff]
    %v155 = vld [vmem:[#allocation5 + $0x248] sm:$0xff]
    %v156 = vld [vmem:[#allocation5 + $0x250] sm:$0xff]
    %v157 = vld [vmem:[#allocation5 + $0x258] sm:$0xff]
    %v158 = vld [vmem:[#allocation5 + $0x260] sm:$0xff]
    %v159 = vld [vmem:[#allocation5 + $0x268] sm:$0xff]
    %v160 = vld [vmem:[#allocation5 + $0x270] sm:$0xff]
    %v161 = vld [vmem:[#allocation5 + $0x278] sm:$0xff]
    %v162 = vld [vmem:[#allocation5 + $0x280] sm:$0xff]
    %v163 = vld [vmem:[#allocation5 + $0x288] sm:$0xff]
    %v164 = vld [vmem:[#allocation5 + $0x290] sm:$0xff]
    %v165 = vld [vmem:[#allocation5 + $0x298] sm:$0xff]
    %v166 = vld [vmem:[#allocation5 + $0x2a0] sm:$0xff]
    %v167 = vld [vmem:[#allocation5 + $0x2a8] sm:$0xff]
    %v168 = vld [vmem:[#allocation5 + $0x2b0] sm:$0xff]
    %v169 = vld [vmem:[#allocation5 + $0x2b8] sm:$0xff]
    %v170 = vld [vmem:[#allocation5 + $0x2c0] sm:$0xff]
    %v171 = vld [vmem:[#allocation5 + $0x2c8] sm:$0xff]
    %v172 = vld [vmem:[#allocation5 + $0x2d0] sm:$0xff]
    %v173 = vld [vmem:[#allocation5 + $0x2d8] sm:$0xff]
    %v174 = vld [vmem:[#allocation5 + $0x2e0] sm:$0xff]
    %v175 = vld [vmem:[#allocation5 + $0x2e8] sm:$0xff]
    %v176 = vld [vmem:[#allocation5 + $0x2f0] sm:$0xff]
    %v177 = vld [vmem:[#allocation5 + $0x2f8] sm:$0xff]
    %v178 = vld [vmem:[#allocation5 + $0x300] sm:$0xff]
    %v179 = vld [vmem:[#allocation5 + $0x308] sm:$0xff]
    %v180 = vld [vmem:[%s2] sm:$0x1]
    %v182 = vlaneseq
    %v183 = vshrl.u32 %v182, 7
    %v184 = vsub.s32 0, %v183
    %v185 = vrot.slane %v180, %v184
    %v189 = vcombine.high %v80, %v80
    %v191 = vunpack.c.l.s4 1983009808
    %v192 = vunpack.c.0.s8 %v191
    %v193 = vlaneseq
    %v194 = vshrl.u32 %v193, 7
    %v195 = vsub.s32 %v192, %v194
    %v196 = vrot.slane %v80, %v195
    %v198 = vunpack.c.l.s4 1983009808
    %v199 = vunpack.c.0.s8 %v198
    %v200 = vlaneseq
    %v201 = vshrl.u32 %v200, 7
    %v202 = vsub.s32 %v199, %v201
    %v203 = vrot.slane %v189, %v202
    %v204 = vcombine.high %v196, %v196
    %v205 = vcombine.high %v203, %v203
    %v206 = vcombine.high %v81, %v81
    %v208 = vunpack.c.l.s4 1983009808
    %v209 = vunpack.c.0.s8 %v208
    %v210 = vlaneseq
    %v211 = vshrl.u32 %v210, 7
    %v212 = vsub.s32 %v209, %v211
    %v213 = vrot.slane %v81, %v212
    %v215 = vunpack.c.l.s4 1983009808
    %v216 = vunpack.c.0.s8 %v215
    %v217 = vlaneseq
    %v218 = vshrl.u32 %v217, 7
    %v219 = vsub.s32 %v216, %v218
    %v220 = vrot.slane %v206, %v219
    %v221 = vcombine.high %v213, %v213
    %vm228 = vcmask 130048
    %v229 = vsel %vm228, %v220, 0
    %231 = vmatprep.subr.mxu0 0.0
    %232 = vmatpush1.msra.mxu0 %v82
    %233 = vmatprep.subr.mxu0 0.0
    %234 = vmatpush1.msra.mxu0 %v83
    %235 = vmatprep.subr.mxu0 0.0
    %236 = vmatpush1.msra.mxu0 %v84
    %237 = vmatprep.subr.mxu0 0.0
    %238 = vmatpush1.msra.mxu0 %v85
    %239 = vmatprep.subr.mxu0 0.0
    %240 = vmatpush1.msra.mxu0 %v86
    %241 = vmatprep.subr.mxu0 0.0
    %242 = vmatpush1.msra.mxu0 %v87
    %243 = vmatprep.subr.mxu0 0.0
    %244 = vmatpush1.msra.mxu0 %v88
    %245 = vmatprep.subr.mxu0 0.0
    %246 = vmatpush1.msra.mxu0 %v89
    %247 = vmatprep.subr.mxu0 0.0
    %248 = vmatpush1.msra.mxu0 %v90
    %249 = vmatprep.subr.mxu0 0.0
    %250 = vmatpush1.msra.mxu0 %v91
    %251 = vmatprep.subr.mxu0 0.0
    %252 = vmatpush1.msra.mxu0 %v92
    %253 = vmatprep.subr.mxu0 0.0
    %254 = vmatpush1.msra.mxu0 %v93
    %255 = vmatprep.subr.mxu0 0.0
    %256 = vmatpush1.msra.mxu0 %v94
    %257 = vmatprep.subr.mxu0 0.0
    %258 = vmatpush1.msra.mxu0 %v95
    %259 = vmatprep.subr.mxu0 0.0
    %260 = vmatpush1.msra.mxu0 %v96
    %261 = vmatprep.subr.mxu0 0.0
    %262 = vmatpush1.msra.mxu0 %v97
    %263 = vmatprep.subr.mxu0 0.0
    %264 = vmatpush1.msra.mxu0 %v98
    %265 = vmatprep.subr.mxu0 0.0
    %266 = vmatpush1.msra.mxu0 %v99
    %267 = vmatprep.subr.mxu0 0.0
    %268 = vmatpush1.msra.mxu0 %v100
    %269 = vmatprep.subr.mxu0 0.0
    %270 = vmatpush1.msra.mxu0 %v101
    %271 = vmatprep.subr.mxu0 0.0
    %272 = vmatpush1.msra.mxu0 %v102
    %273 = vmatprep.subr.mxu0 0.0
    %274 = vmatpush1.msra.mxu0 %v103
    %275 = vmatprep.subr.mxu0 0.0
    %276 = vmatpush1.msra.mxu0 %v104
    %277 = vmatprep.subr.mxu0 0.0
    %278 = vmatpush1.msra.mxu0 %v105
    %279 = vmatprep.subr.mxu0 0.0
    %280 = vmatpush1.msra.mxu0 %v106
    %281 = vmatprep.subr.mxu0 0.0
    %282 = vmatpush1.msra.mxu0 %v107
    %283 = vmatprep.subr.mxu0 0.0
    %284 = vmatpush1.msra.mxu0 %v108
    %285 = vmatprep.subr.mxu0 0.0
    %286 = vmatpush1.msra.mxu0 %v109
    %287 = vmatprep.subr.mxu0 0.0
    %288 = vmatpush1.msra.mxu0 %v110
    %289 = vmatprep.subr.mxu0 0.0
    %290 = vmatpush1.msra.mxu0 %v111
    %291 = vmatprep.subr.mxu0 0.0
    %292 = vmatpush1.msra.mxu0 %v112
    %293 = vmatprep.subr.mxu0 0.0
    %294 = vmatpush1.msra.mxu0 %v113
    %295 = vmatprep.mubr.f32.mxu0 %v204
    %296 = vmatmul.mubr.f32.gmra.mrb[0].mxu0 %v196
    %v297 = vpop.f32.mrb[0].mxu0
    %v298 = vadd.f32 %v185, %v297
    %v299 = vpop.f32.mrb[0].mxu0
    %300 = vdwg.mxu0
    %301 = vmatprep.subr.mxu0 0.0
    %302 = vmatpush1.msra.mxu0 %v114
    %303 = vmatprep.subr.mxu0 0.0
    %304 = vmatpush1.msra.mxu0 %v115
    %305 = vmatprep.subr.mxu0 0.0
    %306 = vmatpush1.msra.mxu0 %v116
    %307 = vmatprep.subr.mxu0 0.0
    %308 = vmatpush1.msra.mxu0 %v117
    %309 = vmatprep.subr.mxu0 0.0
    %310 = vmatpush1.msra.mxu0 %v118
    %311 = vmatprep.subr.mxu0 0.0
    %312 = vmatpush1.msra.mxu0 %v119
    %313 = vmatprep.subr.mxu0 0.0
    %314 = vmatpush1.msra.mxu0 %v120
    %315 = vmatprep.subr.mxu0 0.0
    %316 = vmatpush1.msra.mxu0 %v121
    %317 = vmatprep.subr.mxu0 0.0
    %318 = vmatpush1.msra.mxu0 %v122
    %319 = vmatprep.subr.mxu0 0.0
    %320 = vmatpush1.msra.mxu0 %v123
    %321 = vmatprep.subr.mxu0 0.0
    %322 = vmatpush1.msra.mxu0 %v124
    %323 = vmatprep.subr.mxu0 0.0
    %324 = vmatpush1.msra.mxu0 %v125
    %325 = vmatprep.subr.mxu0 0.0
    %326 = vmatpush1.msra.mxu0 %v126
    %327 = vmatprep.subr.mxu0 0.0
    %328 = vmatpush1.msra.mxu0 %v127
    %329 = vmatprep.subr.mxu0 0.0
    %330 = vmatpush1.msra.mxu0 %v128
    %331 = vmatprep.subr.mxu0 0.0
    %332 = vmatpush1.msra.mxu0 %v129
    %333 = vmatprep.subr.mxu0 0.0
    %334 = vmatpush1.msra.mxu0 %v130
    %335 = vmatprep.subr.mxu0 0.0
    %336 = vmatpush1.msra.mxu0 %v131
    %337 = vmatprep.subr.mxu0 0.0
    %338 = vmatpush1.msra.mxu0 %v132
    %339 = vmatprep.subr.mxu0 0.0
    %340 = vmatpush1.msra.mxu0 %v133
    %341 = vmatprep.subr.mxu0 0.0
    %342 = vmatpush1.msra.mxu0 %v134
    %343 = vmatprep.subr.mxu0 0.0
    %344 = vmatpush1.msra.mxu0 %v135
    %345 = vmatprep.subr.mxu0 0.0
    %346 = vmatpush1.msra.mxu0 %v136
    %347 = vmatprep.subr.mxu0 0.0
    %348 = vmatpush1.msra.mxu0 %v137
    %349 = vmatprep.subr.mxu0 0.0
    %350 = vmatpush1.msra.mxu0 %v138
    %351 = vmatprep.subr.mxu0 0.0
    %352 = vmatpush1.msra.mxu0 %v139
    %353 = vmatprep.subr.mxu0 0.0
    %354 = vmatpush1.msra.mxu0 %v140
    %355 = vmatprep.subr.mxu0 0.0
    %356 = vmatpush1.msra.mxu0 %v141
    %357 = vmatprep.subr.mxu0 0.0
    %358 = vmatpush1.msra.mxu0 %v142
    %359 = vmatprep.subr.mxu0 0.0
    %360 = vmatpush1.msra.mxu0 %v143
    %361 = vmatprep.subr.mxu0 0.0
    %362 = vmatpush1.msra.mxu0 %v144
    %363 = vmatprep.subr.mxu0 0.0
    %364 = vmatpush1.msra.mxu0 %v145
    %365 = vmatprep.mubr.f32.mxu0 %v205
    %366 = vmatmul.mubr.f32.gmra.mrb[0].mxu0 %v203
    %v367 = vpop.f32.mrb[0].mxu0
    %v368 = vadd.f32 %v298, %v367
    %v369 = vpop.f32.mrb[0].mxu0
    %370 = vdwg.mxu0
    %371 = vmatprep.subr.mxu0 0.0
    %372 = vmatpush1.msra.mxu0 %v146
    %373 = vmatprep.subr.mxu0 0.0
    %374 = vmatpush1.msra.mxu0 %v147
    %375 = vmatprep.subr.mxu0 0.0
    %376 = vmatpush1.msra.mxu0 %v148
    %377 = vmatprep.subr.mxu0 0.0
    %378 = vmatpush1.msra.mxu0 %v149
    %379 = vmatprep.subr.mxu0 0.0
    %380 = vmatpush1.msra.mxu0 %v150
    %381 = vmatprep.subr.mxu0 0.0
    %382 = vmatpush1.msra.mxu0 %v151
    %383 = vmatprep.subr.mxu0 0.0
    %384 = vmatpush1.msra.mxu0 %v152
    %385 = vmatprep.subr.mxu0 0.0
    %386 = vmatpush1.msra.mxu0 %v153
    %387 = vmatprep.subr.mxu0 0.0
    %388 = vmatpush1.msra.mxu0 %v154
    %389 = vmatprep.subr.mxu0 0.0
    %390 = vmatpush1.msra.mxu0 %v155
    %391 = vmatprep.subr.mxu0 0.0
    %392 = vmatpush1.msra.mxu0 %v156
    %393 = vmatprep.subr.mxu0 0.0
    %394 = vmatpush1.msra.mxu0 %v157
    %395 = vmatprep.subr.mxu0 0.0
    %396 = vmatpush1.msra.mxu0 %v158
    %397 = vmatprep.subr.mxu0 0.0
    %398 = vmatpush1.msra.mxu0 %v159
    %399 = vmatprep.subr.mxu0 0.0
    %400 = vmatpush1.msra.mxu0 %v160
    %401 = vmatprep.subr.mxu0 0.0
    %402 = vmatpush1.msra.mxu0 %v161
    %403 = vmatprep.subr.mxu0 0.0
    %404 = vmatpush1.msra.mxu0 %v162
    %405 = vmatprep.subr.mxu0 0.0
    %406 = vmatpush1.msra.mxu0 %v163
    %407 = vmatprep.subr.mxu0 0.0
    %408 = vmatpush1.msra.mxu0 %v164
    %409 = vmatprep.subr.mxu0 0.0
    %410 = vmatpush1.msra.mxu0 %v165
    %411 = vmatprep.subr.mxu0 0.0
    %412 = vmatpush1.msra.mxu0 %v166
    %413 = vmatprep.subr.mxu0 0.0
    %414 = vmatpush1.msra.mxu0 %v167
    %415 = vmatprep.subr.mxu0 0.0
    %416 = vmatpush1.msra.mxu0 %v168
    %417 = vmatprep.subr.mxu0 0.0
    %418 = vmatpush1.msra.mxu0 %v169
    %419 = vmatprep.subr.mxu0 0.0
    %420 = vmatpush1.msra.mxu0 %v170
    %421 = vmatprep.subr.mxu0 0.0
    %422 = vmatpush1.msra.mxu0 %v171
    %423 = vmatprep.subr.mxu0 0.0
    %424 = vmatpush1.msra.mxu0 %v172
    %425 = vmatprep.subr.mxu0 0.0
    %426 = vmatpush1.msra.mxu0 %v173
    %427 = vmatprep.subr.mxu0 0.0
    %428 = vmatpush1.msra.mxu0 %v174
    %429 = vmatprep.subr.mxu0 0.0
    %430 = vmatpush1.msra.mxu0 %v175
    %431 = vmatprep.subr.mxu0 0.0
    %432 = vmatpush1.msra.mxu0 %v176
    %433 = vmatprep.subr.mxu0 0.0
    %434 = vmatpush1.msra.mxu0 %v177
    %435 = vmatprep.mubr.f32.mxu0 %v221
    %436 = vmatmul.mubr.f32.gmra.mrb[0].mxu0 %v213
    %v437 = vpop.f32.mrb[0].mxu0
    %v438 = vadd.f32 %v368, %v437
    %v439 = vpop.f32.mrb[0].mxu0
    %440 = vdwg.mxu0
    %441 = vmatprep.subr.mxu0 0.0
    %442 = vmatpush1.msra.mxu0 %v178
    %443 = vmatprep.subr.mxu0 0.0
    %444 = vmatpush1.msra.mxu0 %v179
    %445 = vmatprep.subr.mxu0 0.0
    %446 = vmatpush1.msra.mxu0 0.0
    %447 = vmatprep.subr.mxu0 0.0
    %448 = vmatpush1.msra.mxu0 0.0
    %449 = vmatprep.subr.mxu0 0.0
    %450 = vmatpush1.msra.mxu0 0.0
    %451 = vmatprep.subr.mxu0 0.0
    %452 = vmatpush1.msra.mxu0 0.0
    %453 = vmatprep.subr.mxu0 0.0
    %454 = vmatpush1.msra.mxu0 0.0
    %455 = vmatprep.subr.mxu0 0.0
    %456 = vmatpush1.msra.mxu0 0.0
    %457 = vmatprep.subr.mxu0 0.0
    %458 = vmatpush1.msra.mxu0 0.0
    %459 = vmatprep.subr.mxu0 0.0
    %460 = vmatpush1.msra.mxu0 0.0
    %461 = vmatprep.subr.mxu0 0.0
    %462 = vmatpush1.msra.mxu0 0.0
    %463 = vmatprep.subr.mxu0 0.0
    %464 = vmatpush1.msra.mxu0 0.0
    %465 = vmatprep.subr.mxu0 0.0
    %466 = vmatpush1.msra.mxu0 0.0
    %467 = vmatprep.subr.mxu0 0.0
    %468 = vmatpush1.msra.mxu0 0.0
    %469 = vmatprep.subr.mxu0 0.0
    %470 = vmatpush1.msra.mxu0 0.0
    %471 = vmatprep.subr.mxu0 0.0
    %472 = vmatpush1.msra.mxu0 0.0
    %473 = vmatprep.subr.mxu0 0.0
    %474 = vmatpush1.msra.mxu0 0.0
    %475 = vmatprep.subr.mxu0 0.0
    %476 = vmatpush1.msra.mxu0 0.0
    %477 = vmatprep.subr.mxu0 0.0
    %478 = vmatpush1.msra.mxu0 0.0
    %479 = vmatprep.subr.mxu0 0.0
    %480 = vmatpush1.msra.mxu0 0.0
    %481 = vmatprep.subr.mxu0 0.0
    %482 = vmatpush1.msra.mxu0 0.0
    %483 = vmatprep.subr.mxu0 0.0
    %484 = vmatpush1.msra.mxu0 0.0
    %485 = vmatprep.subr.mxu0 0.0
    %486 = vmatpush1.msra.mxu0 0.0
    %487 = vmatprep.subr.mxu0 0.0
    %488 = vmatpush1.msra.mxu0 0.0
    %489 = vmatprep.subr.mxu0 0.0
    %490 = vmatpush1.msra.mxu0 0.0
    %491 = vmatprep.subr.mxu0 0.0
    %492 = vmatpush1.msra.mxu0 0.0
    %493 = vmatprep.subr.mxu0 0.0
    %494 = vmatpush1.msra.mxu0 0.0
    %495 = vmatprep.subr.mxu0 0.0
    %496 = vmatpush1.msra.mxu0 0.0
    %497 = vmatprep.subr.mxu0 0.0
    %498 = vmatpush1.msra.mxu0 0.0
    %499 = vmatprep.subr.mxu0 0.0
    %500 = vmatpush1.msra.mxu0 0.0
    %501 = vmatprep.subr.mxu0 0.0
    %502 = vmatpush1.msra.mxu0 0.0
    %503 = vmatprep.subr.mxu0 0.0
    %504 = vmatpush1.msra.mxu0 0.0
    %505 = vmatprep.mubr.f32.mxu0 0.0
    %506 = vmatmul.mubr.f32.gmra.mrb[0].mxu0 %v229
    %v507 = vpop.f32.mrb[0].mxu0
    %v508 = vadd.f32 %v438, %v507
    %v509 = vpop.f32.mrb[0].mxu0
    %510 = vdwg.mxu0
    %v511 = vmax.f32 %v508, 0.0
    %v512 = vld [vmem:[#allocation7] sm:$0xff]
    %v513 = vld [vmem:[#allocation7 + $0x8] sm:$0xff]
    %v514 = vld [vmem:[#allocation7 + $0x10] sm:$0xff]
    %v515 = vld [vmem:[#allocation7 + $0x18] sm:$0xff]
    %v516 = vld [vmem:[#allocation7 + $0x20] sm:$0xff]
    %v517 = vld [vmem:[#allocation7 + $0x28] sm:$0xff]
    %v518 = vld [vmem:[#allocation7 + $0x30] sm:$0xff]
    %v519 = vld [vmem:[#allocation7 + $0x38] sm:$0xff]
    %v520 = vld [vmem:[#allocation7 + $0x40] sm:$0xff]
    %v521 = vld [vmem:[#allocation7 + $0x48] sm:$0xff]
    %v522 = vld [vmem:[#allocation7 + $0x50] sm:$0xff]
    %v523 = vld [vmem:[#allocation7 + $0x58] sm:$0xff]
    %v524 = vld [vmem:[#allocation7 + $0x60] sm:$0xff]
    %v525 = vld [vmem:[#allocation7 + $0x68] sm:$0xff]
    %v526 = vld [vmem:[#allocation7 + $0x70] sm:$0xff]
    %v527 = vld [vmem:[#allocation7 + $0x78] sm:$0xff]
    %v528 = vld [vmem:[%s4] sm:$0x1]
    %v530 = vlaneseq
    %v531 = vshrl.u32 %v530, 7
    %v532 = vsub.s32 0, %v531
    %v533 = vrot.slane %v528, %v532
    %535 = vmatprep.subr.mxu0 0.0
    %536 = vmatpush1.msra.mxu0 %v512
    %537 = vmatprep.subr.mxu0 0.0
    %538 = vmatpush1.msra.mxu0 %v513
    %539 = vmatprep.subr.mxu0 0.0
    %540 = vmatpush1.msra.mxu0 %v514
    %541 = vmatprep.subr.mxu0 0.0
    %542 = vmatpush1.msra.mxu0 %v515
    %543 = vmatprep.subr.mxu0 0.0
    %544 = vmatpush1.msra.mxu0 %v516
    %545 = vmatprep.subr.mxu0 0.0
    %546 = vmatpush1.msra.mxu0 %v517
    %547 = vmatprep.subr.mxu0 0.0
    %548 = vmatpush1.msra.mxu0 %v518
    %549 = vmatprep.subr.mxu0 0.0
    %550 = vmatpush1.msra.mxu0 %v519
    %551 = vmatprep.subr.mxu0 0.0
    %552 = vmatpush1.msra.mxu0 %v520
    %553 = vmatprep.subr.mxu0 0.0
    %554 = vmatpush1.msra.mxu0 %v521
    %555 = vmatprep.subr.mxu0 0.0
    %556 = vmatpush1.msra.mxu0 %v522
    %557 = vmatprep.subr.mxu0 0.0
    %558 = vmatpush1.msra.mxu0 %v523
    %559 = vmatprep.subr.mxu0 0.0
    %560 = vmatpush1.msra.mxu0 %v524
    %561 = vmatprep.subr.mxu0 0.0
    %562 = vmatpush1.msra.mxu0 %v525
    %563 = vmatprep.subr.mxu0 0.0
    %564 = vmatpush1.msra.mxu0 %v526
    %565 = vmatprep.subr.mxu0 0.0
    %566 = vmatpush1.msra.mxu0 %v527
    %567 = vmatprep.subr.mxu0 0.0
    %568 = vmatpush1.msra.mxu0 0.0
    %569 = vmatprep.subr.mxu0 0.0
    %570 = vmatpush1.msra.mxu0 0.0
    %571 = vmatprep.subr.mxu0 0.0
    %572 = vmatpush1.msra.mxu0 0.0
    %573 = vmatprep.subr.mxu0 0.0
    %574 = vmatpush1.msra.mxu0 0.0
    %575 = vmatprep.subr.mxu0 0.0
    %576 = vmatpush1.msra.mxu0 0.0
    %577 = vmatprep.subr.mxu0 0.0
    %578 = vmatpush1.msra.mxu0 0.0
    %579 = vmatprep.subr.mxu0 0.0
    %580 = vmatpush1.msra.mxu0 0.0
    %581 = vmatprep.subr.mxu0 0.0
    %582 = vmatpush1.msra.mxu0 0.0
    %583 = vmatprep.subr.mxu0 0.0
    %584 = vmatpush1.msra.mxu0 0.0
    %585 = vmatprep.subr.mxu0 0.0
    %586 = vmatpush1.msra.mxu0 0.0
    %587 = vmatprep.subr.mxu0 0.0
    %588 = vmatpush1.msra.mxu0 0.0
    %589 = vmatprep.subr.mxu0 0.0
    %590 = vmatpush1.msra.mxu0 0.0
    %591 = vmatprep.subr.mxu0 0.0
    %592 = vmatpush1.msra.mxu0 0.0
    %593 = vmatprep.subr.mxu0 0.0
    %594 = vmatpush1.msra.mxu0 0.0
    %595 = vmatprep.subr.mxu0 0.0
    %596 = vmatpush1.msra.mxu0 0.0
    %597 = vmatprep.subr.mxu0 0.0
    %598 = vmatpush1.msra.mxu0 0.0
    %599 = vmatprep.mubr.f32.mxu0 0.0
    %600 = vmatmul.mubr.f32.gmra.mrb[0].mxu0 %v511
    %v601 = vpop.f32.mrb[0].mxu0
    %v602 = vadd.f32 %v533, %v601
    %v603 = vpop.f32.mrb[0].mxu0
    %604 = vdwg.mxu0
    %v605 = vmax.f32 %v602, 0.0
    %v606 = vld [vmem:[#allocation8] sm:$0xff]
    %v607 = vld [vmem:[#allocation8 + $0x8] sm:$0xff]
    %v608 = vld [vmem:[#allocation8 + $0x10] sm:$0xff]
    %v609 = vld [vmem:[#allocation8 + $0x18] sm:$0xff]
    %v610 = vld [vmem:[#allocation8 + $0x20] sm:$0xff]
    %v611 = vld [vmem:[#allocation8 + $0x28] sm:$0xff]
    %v612 = vld [vmem:[#allocation8 + $0x30] sm:$0xff]
    %v613 = vld [vmem:[#allocation8 + $0x38] sm:$0xff]
    %v614 = vld [vmem:[#allocation8 + $0x40] sm:$0xff]
    %v615 = vld [vmem:[#allocation8 + $0x48] sm:$0xff]
    %v616 = vld [vmem:[#allocation8 + $0x50] sm:$0xff]
    %v617 = vld [vmem:[#allocation8 + $0x58] sm:$0xff]
    %v618 = vld [vmem:[#allocation8 + $0x60] sm:$0xff]
    %v619 = vld [vmem:[#allocation8 + $0x68] sm:$0xff]
    %v620 = vld [vmem:[#allocation8 + $0x70] sm:$0xff]
    %v621 = vld [vmem:[#allocation8 + $0x78] sm:$0xff]
    %v622 = vld [vmem:[%s6] sm:$0x1]
    %v624 = vlaneseq
    %v625 = vshrl.u32 %v624, 7
    %v626 = vsub.s32 0, %v625
    %v627 = vrot.slane %v622, %v626
    %629 = vmatprep.subr.mxu0 0.0
    %630 = vmatpush1.msra.mxu0 %v606
    %631 = vmatprep.subr.mxu0 0.0
    %632 = vmatpush1.msra.mxu0 %v607
    %633 = vmatprep.subr.mxu0 0.0
    %634 = vmatpush1.msra.mxu0 %v608
    %635 = vmatprep.subr.mxu0 0.0
    %636 = vmatpush1.msra.mxu0 %v609
    %637 = vmatprep.subr.mxu0 0.0
    %638 = vmatpush1.msra.mxu0 %v610
    %639 = vmatprep.subr.mxu0 0.0
    %640 = vmatpush1.msra.mxu0 %v611
    %641 = vmatprep.subr.mxu0 0.0
    %642 = vmatpush1.msra.mxu0 %v612
    %643 = vmatprep.subr.mxu0 0.0
    %644 = vmatpush1.msra.mxu0 %v613
    %645 = vmatprep.subr.mxu0 0.0
    %646 = vmatpush1.msra.mxu0 %v614
    %647 = vmatprep.subr.mxu0 0.0
    %648 = vmatpush1.msra.mxu0 %v615
    %649 = vmatprep.subr.mxu0 0.0
    %650 = vmatpush1.msra.mxu0 %v616
    %651 = vmatprep.subr.mxu0 0.0
    %652 = vmatpush1.msra.mxu0 %v617
    %653 = vmatprep.subr.mxu0 0.0
    %654 = vmatpush1.msra.mxu0 %v618
    %655 = vmatprep.subr.mxu0 0.0
    %656 = vmatpush1.msra.mxu0 %v619
    %657 = vmatprep.subr.mxu0 0.0
    %658 = vmatpush1.msra.mxu0 %v620
    %659 = vmatprep.subr.mxu0 0.0
    %660 = vmatpush1.msra.mxu0 %v621
    %661 = vmatprep.subr.mxu0 0.0
    %662 = vmatpush1.msra.mxu0 0.0
    %663 = vmatprep.subr.mxu0 0.0
    %664 = vmatpush1.msra.mxu0 0.0
    %665 = vmatprep.subr.mxu0 0.0
    %666 = vmatpush1.msra.mxu0 0.0
    %667 = vmatprep.subr.mxu0 0.0
    %668 = vmatpush1.msra.mxu0 0.0
    %669 = vmatprep.subr.mxu0 0.0
    %670 = vmatpush1.msra.mxu0 0.0
    %671 = vmatprep.subr.mxu0 0.0
    %672 = vmatpush1.msra.mxu0 0.0
    %673 = vmatprep.subr.mxu0 0.0
    %674 = vmatpush1.msra.mxu0 0.0
    %675 = vmatprep.subr.mxu0 0.0
    %676 = vmatpush1.msra.mxu0 0.0
    %677 = vmatprep.subr.mxu0 0.0
    %678 = vmatpush1.msra.mxu0 0.0
    %679 = vmatprep.subr.mxu0 0.0
    %680 = vmatpush1.msra.mxu0 0.0
    %681 = vmatprep.subr.mxu0 0.0
    %682 = vmatpush1.msra.mxu0 0.0
    %683 = vmatprep.subr.mxu0 0.0
    %684 = vmatpush1.msra.mxu0 0.0
    %685 = vmatprep.subr.mxu0 0.0
    %686 = vmatpush1.msra.mxu0 0.0
    %687 = vmatprep.subr.mxu0 0.0
    %688 = vmatpush1.msra.mxu0 0.0
    %689 = vmatprep.subr.mxu0 0.0
    %690 = vmatpush1.msra.mxu0 0.0
    %691 = vmatprep.subr.mxu0 0.0
    %692 = vmatpush1.msra.mxu0 0.0
    %693 = vmatprep.mubr.f32.mxu0 0.0
    %694 = vmatmul.mubr.f32.gmra.mrb[0].mxu0 %v605
    %v695 = vpop.f32.mrb[0].mxu0
    %v696 = vadd.f32 %v627, %v695
    %v697 = vpop.f32.mrb[0].mxu0
    %698 = vdwg.mxu0
    %vm699 = vcmask 123904
    %700 = vst.msk [vmem:[#allocation10] sm:$0x3] %vm699, %v696
    // Predicated region
    $region46: #{tpu_custom_call.1} parent=1 // pred_check
      _
    $region47: #{tpu_custom_call.1} parent=1 // pred_check_branch
      %702 = sbr.rel (0) target = $region49
    $region48: #{tpu_custom_call.1} parent=1 // pred_region
      %s704 = ssub.s32 32, 32
      %705 = vsyncadd [#allocation4], %s704
      %s707 = sshll.u32 [#allocation10], 4
      %s708 = int_to_ptr.vmem [resolvable:$true] %s707
      %710 = dma.vmem_to_hbm [thread:$0]  %s708, 32, %s7, [#allocation4]
    $region49: #{tpu_custom_call.1} parent=1 // pred_fallthru
      _
    // Predicated region
    $region50: #{tpu_custom_call.1} parent=1 // pred_check
      _
    $region51: #{tpu_custom_call.1} parent=1 // pred_check_branch
      %712 = sbr.rel (0) target = $region53
    $region52: #{tpu_custom_call.1} parent=1 // pred_region
      %713 = dma.done [#allocation4], 32
    $region53: #{tpu_custom_call.1} parent=1 // pred_fallthru
      _
    %714 = vsyncpa [#allocation3], 1
    %715 = vsyncpa [#allocation6], 1
    %716 = vsyncpa [#allocation9], 1
    %717 = vsyncpa [#allocation4], 1

</llo_original>
